<compile_context>
chip_gen: v5e
topology: v5e:2x2
jax: 0.10.0
libtpu: 0.0.40
codegen_flags: <defaults>
</compile_context>

<pallas_src>
import jax
import jax.numpy as jnp
from jax.experimental import pallas as pl
from jax.experimental.pallas import tpu as pltpu

_LANES = 512          # last dim of the 2D slab (multiple of 128 -> lane dense)
_MAX_BLOCK_ROWS = 1024  # (1024, 512) f32 tile = 2 MiB


def _relu_kernel(x_ref, o_ref):
    # Pure elementwise hot path on the VPU: one max per vreg, scalar constant
    # (avoids materializing a broadcast zero tile).
    o_ref[...] = jnp.maximum(x_ref[...], 0.0)


def relu_pallas(x):
    """Elementwise ReLU on an NCHW (or any-shape) array; returns same shape/dtype."""
    orig_shape = x.shape
    total = x.size

    # ---- lane-dense 2D repack (done in the wrapper, outside the kernel) ----
    rows = -(-total // _LANES)  # ceil
    if rows >= _MAX_BLOCK_ROWS:
        block_rows = _MAX_BLOCK_ROWS
    else:
        # small input: one block, rows rounded up to a sublane multiple (8)
        block_rows = max(8, ((rows + 7) // 8) * 8)
    rows_padded = ((rows + block_rows - 1) // block_rows) * block_rows

    flat = x.reshape(-1)
    pad = rows_padded * _LANES - total
    if pad:
        flat = jnp.pad(flat, (0, pad))
    x2d = flat.reshape(rows_padded, _LANES)

    grid = (rows_padded // block_rows,)

    out2d = pl.pallas_call(
        _relu_kernel,
        out_shape=jax.ShapeDtypeStruct((rows_padded, _LANES), x.dtype),
        grid_spec=pltpu.PrefetchScalarGridSpec(
            num_scalar_prefetch=0,
            grid=grid,
            in_specs=[pl.BlockSpec((block_rows, _LANES), lambda i: (i, 0))],
            out_specs=pl.BlockSpec((block_rows, _LANES), lambda i: (i, 0)),
        ),
        compiler_params=pltpu.CompilerParams(
            dimension_semantics=("parallel",),  # v7x: shard rows across both TCs
        ),
    )(x2d)

    return out2d.reshape(-1)[:total].reshape(orig_shape)


class Model:
    """JAX/Pallas port of the PyTorch Model (ReLU forward)."""

    def __init__(self):
        pass  # no parameters (ReLU / Sigmoid are parameter-free)

    def forward(self, x):
        return relu_pallas(x)

    __call__ = forward


if __name__ == "__main__":
    key = jax.random.PRNGKey(0)
    # Mirror the script's reshape: input -> (-1, 1, 2, 2). Use 2048 elements.
    flat = jax.random.normal(key, (512 * 1 * 2 * 2,), dtype=jnp.float32)
    x = flat.reshape(-1, 1, 2, 2)  # NCHW (512, 1, 2, 2)

    model = Model()
    out = model(x)
    out = jax.block_until_ready(out)

    # correctness check against plain JAX reference
    ref = jnp.maximum(x, 0.0)
    assert out.shape == x.shape and out.dtype == x.dtype
    assert jnp.allclose(out, ref), "mismatch vs reference ReLU"
    print("KERNEL_OK")
</pallas_src>

<mosaic_0001>
module attributes {stable_mosaic.version = 11 : i64} {
  func.func @_relu_kernel(%arg0: i32, %arg1: memref<8x512xf32, #tpu.memory_space<vmem>>, %arg2: memref<8x512xf32, #tpu.memory_space<vmem>>) attributes {dimension_semantics = [#tpu.dimension_semantics<parallel>], iteration_bounds = array<i64: 1>, scalar_prefetch = 0 : i64, scratch_operands = 0 : i64, tpu.core_type = #tpu.core_type<tc>, window_params = [{transform_indices = @transform_0, window_bounds = array<i64: 8, 512>}, {transform_indices = @transform_1, window_bounds = array<i64: 8, 512>}]} {
    %c0 = arith.constant 0 : index
    %c0_0 = arith.constant 0 : index
    %0 = vector.load %arg1[%c0, %c0_0] : memref<8x512xf32, #tpu.memory_space<vmem>>, vector<8x512xf32>
    %cst = arith.constant 0.000000e+00 : f32
    %1 = vector.broadcast %cst : f32 to vector<8x512xf32>
    %2 = arith.maximumf %0, %1 : vector<8x512xf32>
    %c0_1 = arith.constant 0 : index
    %c0_2 = arith.constant 0 : index
    %3 = vector.load %arg2[%c0_1, %c0_2] : memref<8x512xf32, #tpu.memory_space<vmem>>, vector<8x512xf32>
    tpu.vector_store %arg2[%c0_1, %c0_2], %2 {strides = array<i32>} : memref<8x512xf32, #tpu.memory_space<vmem>>, vector<8x512xf32>,
    return
  }
  func.func @transform_0(%arg0: i32) -> (i32, i32) {
    %c0_i32 = arith.constant 0 : i32
    %c0_i32_0 = arith.constant 0 : i32
    return %arg0, %c0_i32 : i32, i32
  }
  func.func @transform_1(%arg0: i32) -> (i32, i32) {
    %c0_i32 = arith.constant 0 : i32
    %c0_i32_0 = arith.constant 0 : i32
    return %arg0, %c0_i32 : i32, i32
  }
}

</mosaic_0001>

<llo_original>
// kernel: tpu_custom_call.1
$region0: #{tpu_custom_call.1}
  #allocation0 [shape = 'u32[]', space=smem, size = 0x4, offset = 0x4, fixed_abs, tag = 'smem constant byte address 0x4 - core index']
  #allocation1 [shape = 'u32[72,128]{1,0:T(1,128)}', space=vmem, size = 0x9000, scoped, tag = 'internal scratch']
  %s0 = inlined_call_operand.hbm [shape: f32[8,512], index: 0, kind: input, shape index: {}]
  %s1 = inlined_call_operand.hbm [shape: f32[8,512], index: 1, kind: output, shape index: {}]
  %s2 = sld [smem:[#allocation0]]
  $region18: #{tpu_custom_call.1} parent=0
    _
  %s4 = ssub.s32 1, %s2
  %s5 = scalar_select 0, %s4, %s2
  $region1: #{tpu_custom_call.1} parent=0
    #allocation2 [shape = 'u8[16384]{0}', space=vmem, size = 0x4000, scoped, tag = 'input window, operand 0, single buffered']
    #allocation3 [shape = 's32[1]{0}', space=sflag, size = 0x4, scoped, tag = 'scoped memory for tpu_custom_call.1']
    #allocation4 [shape = 's32[1]{0}', space=sflag, size = 0x4, scoped, tag = 'scoped memory for tpu_custom_call.1']
    #allocation5 [shape = 'u8[16384]{0}', space=vmem, size = 0x4000, scoped, tag = 'output window, operand 0, single buffered']
    %6 = vsyncpa [#allocation3], 0
    %7 = vsyncpa [#allocation4], 0
    // Predicated region
    $region2: #{tpu_custom_call.1} parent=1 // pred_check
      _
    $region3: #{tpu_custom_call.1} parent=1 // pred_check_branch
      %9 = sbr.rel (0) target = $region5
    $region4: #{tpu_custom_call.1} parent=1 // pred_region
      %11 = vsyncadd [#allocation3], 0
      %s13 = sshll.u32 %s0, 4
      %s14 = int_to_ptr.hbm [resolvable:$true] %s13
      %s15 = sshll.u32 [#allocation2], 4
      %s16 = int_to_ptr.vmem [resolvable:$true] %s15
      %18 = dma.hbm_to_vmem [thread:$0]  %s14, 512, %s16, [#allocation3]
    $region5: #{tpu_custom_call.1} parent=1 // pred_fallthru
      _
    // Predicated region
    $region6: #{tpu_custom_call.1} parent=1 // pred_check
      _
    $region7: #{tpu_custom_call.1} parent=1 // pred_check_branch
      %20 = sbr.rel (0) target = $region9
    $region8: #{tpu_custom_call.1} parent=1 // pred_region
      %22 = dma.done [#allocation3], 512
    $region9: #{tpu_custom_call.1} parent=1 // pred_fallthru
      _
    %v23 = vld [vmem:[#allocation2] sm:$0xff]
    %v24 = vld [vmem:[#allocation2 + $0x8] sm:$0xff]
    %v25 = vld [vmem:[#allocation2 + $0x10] sm:$0xff]
    %v26 = vld [vmem:[#allocation2 + $0x18] sm:$0xff]
    %v27 = vmax.f32 %v23, 0.0
    %v28 = vmax.f32 %v24, 0.0
    %v29 = vmax.f32 %v25, 0.0
    %v30 = vmax.f32 %v26, 0.0
    %31 = vst [vmem:[#allocation5] sm:$0xff] %v27
    %32 = vst [vmem:[#allocation5 + $0x8] sm:$0xff] %v28
    %33 = vst [vmem:[#allocation5 + $0x10] sm:$0xff] %v29
    %34 = vst [vmem:[#allocation5 + $0x18] sm:$0xff] %v30
    // Predicated region
    $region10: #{tpu_custom_call.1} parent=1 // pred_check
      _
    $region11: #{tpu_custom_call.1} parent=1 // pred_check_branch
      %36 = sbr.rel (0) target = $region13
    $region12: #{tpu_custom_call.1} parent=1 // pred_region
      %38 = vsyncadd [#allocation4], 0
      %s40 = sshll.u32 [#allocation5], 4
      %s41 = int_to_ptr.vmem [resolvable:$true] %s40
      %s42 = sshll.u32 %s1, 4
      %s43 = int_to_ptr.hbm [resolvable:$true] %s42
      %45 = dma.vmem_to_hbm [thread:$0]  %s41, 512, %s43, [#allocation4]
    $region13: #{tpu_custom_call.1} parent=1 // pred_fallthru
      _
    // Predicated region
    $region14: #{tpu_custom_call.1} parent=1 // pred_check
      _
    $region15: #{tpu_custom_call.1} parent=1 // pred_check_branch
      %47 = sbr.rel (0) target = $region17
    $region16: #{tpu_custom_call.1} parent=1 // pred_region
      %49 = dma.done [#allocation4], 512
    $region17: #{tpu_custom_call.1} parent=1 // pred_fallthru
      _
    %50 = vsyncpa [#allocation3], 1
    %51 = vsyncpa [#allocation4], 1

</llo_original>
